<compile_context>
chip_gen: v7x
topology: tpu7x:2x2x1
jax: 0.10.0
libtpu: 0.0.40
codegen_flags: <defaults>
</compile_context>

<pallas_src>
import functools

import jax
import jax.numpy as jnp
from jax.experimental import pallas as pl
from jax.experimental.pallas import tpu as pltpu

_LANE = 128      # lane width (last dim)
_SUBLANE = 8     # sublane width (second-to-last dim)


def _round_up(x, m):
    return (x + m - 1) // m * m


def _generator_mlp_kernel(x_ref,
                          w1_ref, b1_ref,
                          w2_ref, b2_ref,
                          w3_ref, b3_ref,
                          w4_ref, b4_ref,
                          out_ref):
    """Fused 4-layer MLP forward for one lane-dense batch tile (all in VMEM)."""

    def layer(h, w_ref, b_ref, relu):
        # Feed the MXU in the weights' storage dtype (bf16 -> 256^2 MXU path on
        # v6e/v7x), accumulate in f32, keep bias-add/ReLU in f32.
        acc = jnp.dot(h.astype(w_ref.dtype), w_ref[...],
                      preferred_element_type=jnp.float32)
        acc = acc + b_ref[...].astype(jnp.float32)
        if relu:
            acc = jnp.maximum(acc, 0.0)
        return acc

    h = layer(x_ref[...], w1_ref, b1_ref, relu=True)
    h = layer(h, w2_ref, b2_ref, relu=True)
    h = layer(h, w3_ref, b3_ref, relu=True)
    y = layer(h, w4_ref, b4_ref, relu=False)
    out_ref[...] = y.astype(out_ref.dtype)      # lane-dense (128-wide) store


def init_generator_params(key, dim_g, dim_z, out_dim=2, dtype=jnp.float32):
    """PyTorch-nn.Linear-style init: U(-1/sqrt(fan_in), 1/sqrt(fan_in))."""
    dims = [(dim_z, dim_g), (dim_g, dim_g), (dim_g, dim_g), (dim_g, out_dim)]
    params = {}
    for i, (fan_in, fan_out) in enumerate(dims, start=1):
        key, kw, kb = jax.random.split(key, 3)
        bound = 1.0 / float(fan_in) ** 0.5
        params[f"w{i}"] = jax.random.uniform(
            kw, (fan_in, fan_out), dtype, minval=-bound, maxval=bound)
        params[f"b{i}"] = jax.random.uniform(
            kb, (1, fan_out), dtype, minval=-bound, maxval=bound)
    return params


def _pad2(a, rows, cols):
    return jnp.pad(a, ((0, rows - a.shape[0]), (0, cols - a.shape[1])))


def _choose_batch_tile(batch):
    """Batch tile: multiple of 8, <= 512 rows, and >= 2 grid steps when the
    batch allows (so v7x's two TensorCores both get a 'parallel' slice)."""
    b8 = _round_up(batch, _SUBLANE)
    if b8 <= _SUBLANE:
        return _SUBLANE
    if b8 > 2 * 512:
        return 512
    return min(512, _round_up(pl.cdiv(b8, 2), _SUBLANE))


@functools.partial(jax.jit, static_argnames=("batch_tile",))
def generator_forward(x, params, batch_tile=None):
    """Pallas forward of Generator: x [B, dim_z] -> [B, out_dim].

    Feature dims are zero-padded to 128 lanes and the batch is tiled so every
    op in the kernel is lane-dense and the x/out DMAs pipeline across grid
    steps.  Zero padding is numerically exact.
    TODO(synk): in a real training loop, pre-pad the params once at init time
    instead of per call, and consider pipeline_mode=pl.Buffered(1) on the
    resident weight blocks to halve their VMEM footprint.
    """
    batch, dim_z = x.shape
    dim_g = params["w1"].shape[1]
    out_dim = params["w4"].shape[1]

    dz_p = _round_up(dim_z, _LANE)
    dg_p = _round_up(dim_g, _LANE)
    do_p = _round_up(out_dim, _LANE)

    tb = (_choose_batch_tile(batch) if batch_tile is None
          else _round_up(int(batch_tile), _SUBLANE))
    b_p = _round_up(batch, tb)
    grid = (b_p // tb,)

    # Zero-pad inputs / params to lane-dense shapes (exact).
    x_p = jnp.pad(x, ((0, b_p - batch), (0, dz_p - dim_z)))
    w1 = _pad2(params["w1"], dz_p, dg_p); b1 = _pad2(params["b1"], 1, dg_p)
    w2 = _pad2(params["w2"], dg_p, dg_p); b2 = _pad2(params["b2"], 1, dg_p)
    w3 = _pad2(params["w3"], dg_p, dg_p); b3 = _pad2(params["b3"], 1, dg_p)
    w4 = _pad2(params["w4"], dg_p, do_p); b4 = _pad2(params["b4"], 1, do_p)

    x_spec = pl.BlockSpec((tb, dz_p), lambda i: (i, 0))
    out_spec = pl.BlockSpec((tb, do_p), lambda i: (i, 0))

    def _resident(a):
        # Constant block index across the grid -> fetched once, stays in VMEM.
        return pl.BlockSpec(a.shape, lambda i: (0,) * a.ndim)

    in_specs = [x_spec,
                _resident(w1), _resident(b1),
                _resident(w2), _resident(b2),
                _resident(w3), _resident(b3),
                _resident(w4), _resident(b4)]

    # Advisory cost estimate (logical flops / bytes) for the XLA scheduler.
    p_bytes = sum(a.size * a.dtype.itemsize
                  for a in (w1, b1, w2, b2, w3, b3, w4, b4))
    flops = 2 * batch * (dim_z * dim_g + 2 * dim_g * dim_g + dim_g * out_dim)
    cost = pl.CostEstimate(
        flops=int(flops),
        transcendentals=0,
        bytes_accessed=int(p_bytes
                           + x_p.size * x_p.dtype.itemsize
                           + b_p * do_p * x.dtype.itemsize))

    # Explicit VMEM budget: params (double-buffered by default) + 2x (x, out)
    # tiles + f32 intermediates, with slack.  Clamped so it stays sane on
    # v7x (64 MiB physical) while allowing big tiles on v5e/v6e (128 MiB).
    vmem_est = (2 * p_bytes
                + 2 * (tb * dz_p + tb * do_p) * x.dtype.itemsize
                + 4 * tb * dg_p * 4)
    vmem_limit = int(min(max(int(vmem_est * 1.5), 32 * 1024 * 1024),
                         128 * 1024 * 1024))

    y_p = pl.pallas_call(
        _generator_mlp_kernel,
        out_shape=jax.ShapeDtypeStruct((b_p, do_p), x.dtype),
        grid_spec=pltpu.PrefetchScalarGridSpec(
            num_scalar_prefetch=0,
            grid=grid,
            in_specs=in_specs,
            out_specs=out_spec,
        ),
        compiler_params=pltpu.CompilerParams(
            dimension_semantics=("parallel",),
            vmem_limit_bytes=vmem_limit),
        cost_estimate=cost,
    )(x_p, w1, b1, w2, b2, w3, b3, w4, b4)

    # Strip batch and lane padding.
    return y_p[:batch, :out_dim]


def _reference_forward(x, params):
    """Plain-JAX reference (mirrors the PyTorch MLP generator)."""
    h = jax.nn.relu(x @ params["w1"] + params["b1"])
    h = jax.nn.relu(h @ params["w2"] + params["b2"])
    h = jax.nn.relu(h @ params["w3"] + params["b3"])
    return h @ params["w4"] + params["b4"]


if __name__ == "__main__":
    # Small shapes consistent with the module: dim_z = latent size, dim_g = hidden.
    batch, dim_z, dim_g, out_dim = 8, 8, 32, 2

    key = jax.random.PRNGKey(0)
    key_p, key_x, key_x2 = jax.random.split(key, 3)
    params = init_generator_params(key_p, dim_g=dim_g, dim_z=dim_z, out_dim=out_dim)

    x = jax.random.normal(key_x, (batch, dim_z), dtype=jnp.float32)
    y = jax.block_until_ready(generator_forward(x, params))
    y_ref = _reference_forward(x, params)
    assert y.shape == (batch, out_dim)
    assert jnp.allclose(y, y_ref, atol=1e-5, rtol=1e-5), "mismatch vs reference"

    # Second check: ragged batch -> exercises batch tiling (>=2 grid steps),
    # row padding and the padded-output slice.
    x2 = jax.random.normal(key_x2, (19, dim_z), dtype=jnp.float32)
    y2 = jax.block_until_ready(generator_forward(x2, params))
    assert y2.shape == (19, out_dim)
    assert jnp.allclose(y2, _reference_forward(x2, params), atol=1e-5, rtol=1e-5), \
        "mismatch vs reference (tiled batch)"

    print("KERNEL_OK")
</pallas_src>

<mosaic_0001>
module attributes {stable_mosaic.version = 11 : i64} {
  func.func @_generator_mlp_kernel(%arg0: i32, %arg1: memref<8x128xf32, #tpu.memory_space<vmem>>, %arg2: memref<128x128xf32, #tpu.memory_space<vmem>>, %arg3: memref<1x128xf32, #tpu.memory_space<vmem>>, %arg4: memref<128x128xf32, #tpu.memory_space<vmem>>, %arg5: memref<1x128xf32, #tpu.memory_space<vmem>>, %arg6: memref<128x128xf32, #tpu.memory_space<vmem>>, %arg7: memref<1x128xf32, #tpu.memory_space<vmem>>, %arg8: memref<128x128xf32, #tpu.memory_space<vmem>>, %arg9: memref<1x128xf32, #tpu.memory_space<vmem>>, %arg10: memref<8x128xf32, #tpu.memory_space<vmem>>) attributes {dimension_semantics = [#tpu.dimension_semantics<parallel>], iteration_bounds = array<i64: 1>, scalar_prefetch = 0 : i64, scratch_operands = 0 : i64, tpu.core_type = #tpu.core_type<tc>, window_params = [{transform_indices = @transform_0, window_bounds = array<i64: 8, 128>}, {pipeline_mode = #tpu.pipeline_mode<synchronous>, transform_indices = @transform_1, window_bounds = array<i64: 128, 128>}, {pipeline_mode = #tpu.pipeline_mode<synchronous>, transform_indices = @transform_2, window_bounds = array<i64: 1, 128>}, {pipeline_mode = #tpu.pipeline_mode<synchronous>, transform_indices = @transform_3, window_bounds = array<i64: 128, 128>}, {pipeline_mode = #tpu.pipeline_mode<synchronous>, transform_indices = @transform_4, window_bounds = array<i64: 1, 128>}, {pipeline_mode = #tpu.pipeline_mode<synchronous>, transform_indices = @transform_5, window_bounds = array<i64: 128, 128>}, {pipeline_mode = #tpu.pipeline_mode<synchronous>, transform_indices = @transform_6, window_bounds = array<i64: 1, 128>}, {pipeline_mode = #tpu.pipeline_mode<synchronous>, transform_indices = @transform_7, window_bounds = array<i64: 128, 128>}, {pipeline_mode = #tpu.pipeline_mode<synchronous>, transform_indices = @transform_8, window_bounds = array<i64: 1, 128>}, {transform_indices = @transform_9, window_bounds = array<i64: 8, 128>}]} {
    %c0 = arith.constant 0 : index
    %c0_0 = arith.constant 0 : index
    %0 = vector.load %arg1[%c0, %c0_0] : memref<8x128xf32, #tpu.memory_space<vmem>>, vector<8x128xf32>
    %c0_1 = arith.constant 0 : index
    %c0_2 = arith.constant 0 : index
    %1 = vector.load %arg2[%c0_1, %c0_2] : memref<128x128xf32, #tpu.memory_space<vmem>>, vector<128x128xf32>
    %cst = arith.constant dense<0.000000e+00> : vector<8x128xf32>
    %2 = tpu.matmul %0, %1, %cst {dimension_numbers = #tpu.dot_dimension_numbers<[1], [0], [0], [1], [0, 0, 1, 1], [], []>} : vector<8x128xf32>, vector<128x128xf32>, vector<8x128xf32> -> vector<8x128xf32>
    %c0_3 = arith.constant 0 : index
    %c0_4 = arith.constant 0 : index
    %3 = vector.load %arg3[%c0_3, %c0_4] : memref<1x128xf32, #tpu.memory_space<vmem>>, vector<1x128xf32>
    %4 = vector.broadcast %3 : vector<1x128xf32> to vector<8x128xf32>
    %5 = arith.addf %2, %4 : vector<8x128xf32>
    %cst_5 = arith.constant 0.000000e+00 : f32
    %6 = vector.broadcast %cst_5 : f32 to vector<8x128xf32>
    %7 = arith.maximumf %5, %6 : vector<8x128xf32>
    %c0_6 = arith.constant 0 : index
    %c0_7 = arith.constant 0 : index
    %8 = vector.load %arg4[%c0_6, %c0_7] : memref<128x128xf32, #tpu.memory_space<vmem>>, vector<128x128xf32>
    %cst_8 = arith.constant dense<0.000000e+00> : vector<8x128xf32>
    %9 = tpu.matmul %7, %8, %cst_8 {dimension_numbers = #tpu.dot_dimension_numbers<[1], [0], [0], [1], [0, 0, 1, 1], [], []>} : vector<8x128xf32>, vector<128x128xf32>, vector<8x128xf32> -> vector<8x128xf32>
    %c0_9 = arith.constant 0 : index
    %c0_10 = arith.constant 0 : index
    %10 = vector.load %arg5[%c0_9, %c0_10] : memref<1x128xf32, #tpu.memory_space<vmem>>, vector<1x128xf32>
    %11 = vector.broadcast %10 : vector<1x128xf32> to vector<8x128xf32>
    %12 = arith.addf %9, %11 : vector<8x128xf32>
    %cst_11 = arith.constant 0.000000e+00 : f32
    %13 = vector.broadcast %cst_11 : f32 to vector<8x128xf32>
    %14 = arith.maximumf %12, %13 : vector<8x128xf32>
    %c0_12 = arith.constant 0 : index
    %c0_13 = arith.constant 0 : index
    %15 = vector.load %arg6[%c0_12, %c0_13] : memref<128x128xf32, #tpu.memory_space<vmem>>, vector<128x128xf32>
    %cst_14 = arith.constant dense<0.000000e+00> : vector<8x128xf32>
    %16 = tpu.matmul %14, %15, %cst_14 {dimension_numbers = #tpu.dot_dimension_numbers<[1], [0], [0], [1], [0, 0, 1, 1], [], []>} : vector<8x128xf32>, vector<128x128xf32>, vector<8x128xf32> -> vector<8x128xf32>
    %c0_15 = arith.constant 0 : index
    %c0_16 = arith.constant 0 : index
    %17 = vector.load %arg7[%c0_15, %c0_16] : memref<1x128xf32, #tpu.memory_space<vmem>>, vector<1x128xf32>
    %18 = vector.broadcast %17 : vector<1x128xf32> to vector<8x128xf32>
    %19 = arith.addf %16, %18 : vector<8x128xf32>
    %cst_17 = arith.constant 0.000000e+00 : f32
    %20 = vector.broadcast %cst_17 : f32 to vector<8x128xf32>
    %21 = arith.maximumf %19, %20 : vector<8x128xf32>
    %c0_18 = arith.constant 0 : index
    %c0_19 = arith.constant 0 : index
    %22 = vector.load %arg8[%c0_18, %c0_19] : memref<128x128xf32, #tpu.memory_space<vmem>>, vector<128x128xf32>
    %cst_20 = arith.constant dense<0.000000e+00> : vector<8x128xf32>
    %23 = tpu.matmul %21, %22, %cst_20 {dimension_numbers = #tpu.dot_dimension_numbers<[1], [0], [0], [1], [0, 0, 1, 1], [], []>} : vector<8x128xf32>, vector<128x128xf32>, vector<8x128xf32> -> vector<8x128xf32>
    %c0_21 = arith.constant 0 : index
    %c0_22 = arith.constant 0 : index
    %24 = vector.load %arg9[%c0_21, %c0_22] : memref<1x128xf32, #tpu.memory_space<vmem>>, vector<1x128xf32>
    %25 = vector.broadcast %24 : vector<1x128xf32> to vector<8x128xf32>
    %26 = arith.addf %23, %25 : vector<8x128xf32>
    %c0_23 = arith.constant 0 : index
    %c0_24 = arith.constant 0 : index
    %27 = vector.load %arg10[%c0_23, %c0_24] : memref<8x128xf32, #tpu.memory_space<vmem>>, vector<8x128xf32>
    tpu.vector_store %arg10[%c0_23, %c0_24], %26 {strides = array<i32>} : memref<8x128xf32, #tpu.memory_space<vmem>>, vector<8x128xf32>,
    return
  }
  func.func @transform_0(%arg0: i32) -> (i32, i32) {
    %c0_i32 = arith.constant 0 : i32
    %c0_i32_0 = arith.constant 0 : i32
    return %arg0, %c0_i32 : i32, i32
  }
  func.func @transform_1(%arg0: i32) -> (i32, i32) {
    %c0_i32 = arith.constant 0 : i32
    %c0_i32_0 = arith.constant 0 : i32
    %c0_i32_1 = arith.constant 0 : i32
    return %c0_i32, %c0_i32_0 : i32, i32
  }
  func.func @transform_2(%arg0: i32) -> (i32, i32) {
    %c0_i32 = arith.constant 0 : i32
    %c0_i32_0 = arith.constant 0 : i32
    %c0_i32_1 = arith.constant 0 : i32
    return %c0_i32, %c0_i32_0 : i32, i32
  }
  func.func @transform_3(%arg0: i32) -> (i32, i32) {
    %c0_i32 = arith.constant 0 : i32
    %c0_i32_0 = arith.constant 0 : i32
    %c0_i32_1 = arith.constant 0 : i32
    return %c0_i32, %c0_i32_0 : i32, i32
  }
  func.func @transform_4(%arg0: i32) -> (i32, i32) {
    %c0_i32 = arith.constant 0 : i32
    %c0_i32_0 = arith.constant 0 : i32
    %c0_i32_1 = arith.constant 0 : i32
    return %c0_i32, %c0_i32_0 : i32, i32
  }
  func.func @transform_5(%arg0: i32) -> (i32, i32) {
    %c0_i32 = arith.constant 0 : i32
    %c0_i32_0 = arith.constant 0 : i32
    %c0_i32_1 = arith.constant 0 : i32
    return %c0_i32, %c0_i32_0 : i32, i32
  }
  func.func @transform_6(%arg0: i32) -> (i32, i32) {
    %c0_i32 = arith.constant 0 : i32
    %c0_i32_0 = arith.constant 0 : i32
    %c0_i32_1 = arith.constant 0 : i32
    return %c0_i32, %c0_i32_0 : i32, i32
  }
  func.func @transform_7(%arg0: i32) -> (i32, i32) {
    %c0_i32 = arith.constant 0 : i32
    %c0_i32_0 = arith.constant 0 : i32
    %c0_i32_1 = arith.constant 0 : i32
    return %c0_i32, %c0_i32_0 : i32, i32
  }
  func.func @transform_8(%arg0: i32) -> (i32, i32) {
    %c0_i32 = arith.constant 0 : i32
    %c0_i32_0 = arith.constant 0 : i32
    %c0_i32_1 = arith.constant 0 : i32
    return %c0_i32, %c0_i32_0 : i32, i32
  }
  func.func @transform_9(%arg0: i32) -> (i32, i32) {
    %c0_i32 = arith.constant 0 : i32
    %c0_i32_0 = arith.constant 0 : i32
    return %arg0, %c0_i32 : i32, i32
  }
}

</mosaic_0001>

<llo_original>
// kernel: generator_forward.1
$region0: #{generator_forward.1}
  #allocation0 [shape = 'u32[]', space=smem, size = 0x4, offset = 0x4, fixed_abs, tag = 'smem constant byte address 0x4 - core index']
  #allocation1 [shape = 'u32[144,128]{1,0:T(1,128)}', space=vmem, size = 0x12000, scoped, tag = 'internal scratch']
  %s0 = inlined_call_operand.vmem [shape: f32[8,128], index: 0, kind: input, shape index: {}]
  %s1 = inlined_call_operand.vmem [shape: f32[128,128], index: 1, kind: input, shape index: {}]
  %s2 = inlined_call_operand.vmem [shape: f32[1,128], index: 2, kind: input, shape index: {}]
  %s3 = inlined_call_operand.vmem [shape: f32[128,128], index: 3, kind: input, shape index: {}]
  %s4 = inlined_call_operand.vmem [shape: f32[1,128], index: 4, kind: input, shape index: {}]
  %s5 = inlined_call_operand.vmem [shape: f32[128,128], index: 5, kind: input, shape index: {}]
  %s6 = inlined_call_operand.vmem [shape: f32[1,128], index: 6, kind: input, shape index: {}]
  %s7 = inlined_call_operand.vmem [shape: f32[128,128], index: 7, kind: input, shape index: {}]
  %s8 = inlined_call_operand.vmem [shape: f32[1,128], index: 8, kind: input, shape index: {}]
  %s9 = inlined_call_operand.vmem [shape: f32[8,128], index: 9, kind: output, shape index: {}]
  %s10 = sld [smem:[#allocation0]]
  $region46: #{generator_forward.1} parent=0
    _
  %s12 = ssub.s32 1, %s10
  %s13 = scalar_select 0, %s12, %s10
  // Predicated region
  $region2: #{generator_forward.1} parent=0 // pred_check
    _
  $region3: #{generator_forward.1} parent=0 // pred_check_branch
    %15 = sbr.rel (0) target = $region5
  $region4: #{generator_forward.1} parent=0 // pred_region
    _
  $region5: #{generator_forward.1} parent=0 // pred_fallthru
    _
  // Predicated region
  $region6: #{generator_forward.1} parent=0 // pred_check
    _
  $region7: #{generator_forward.1} parent=0 // pred_check_branch
    %17 = sbr.rel (0) target = $region9
  $region8: #{generator_forward.1} parent=0 // pred_region
    _
  $region9: #{generator_forward.1} parent=0 // pred_fallthru
    _
  // Predicated region
  $region10: #{generator_forward.1} parent=0 // pred_check
    _
  $region11: #{generator_forward.1} parent=0 // pred_check_branch
    %19 = sbr.rel (0) target = $region13
  $region12: #{generator_forward.1} parent=0 // pred_region
    _
  $region13: #{generator_forward.1} parent=0 // pred_fallthru
    _
  // Predicated region
  $region14: #{generator_forward.1} parent=0 // pred_check
    _
  $region15: #{generator_forward.1} parent=0 // pred_check_branch
    %21 = sbr.rel (0) target = $region17
  $region16: #{generator_forward.1} parent=0 // pred_region
    _
  $region17: #{generator_forward.1} parent=0 // pred_fallthru
    _
  // Predicated region
  $region18: #{generator_forward.1} parent=0 // pred_check
    _
  $region19: #{generator_forward.1} parent=0 // pred_check_branch
    %23 = sbr.rel (0) target = $region21
  $region20: #{generator_forward.1} parent=0 // pred_region
    _
  $region21: #{generator_forward.1} parent=0 // pred_fallthru
    _
  // Predicated region
  $region22: #{generator_forward.1} parent=0 // pred_check
    _
  $region23: #{generator_forward.1} parent=0 // pred_check_branch
    %25 = sbr.rel (0) target = $region25
  $region24: #{generator_forward.1} parent=0 // pred_region
    _
  $region25: #{generator_forward.1} parent=0 // pred_fallthru
    _
  // Predicated region
  $region26: #{generator_forward.1} parent=0 // pred_check
    _
  $region27: #{generator_forward.1} parent=0 // pred_check_branch
    %27 = sbr.rel (0) target = $region29
  $region28: #{generator_forward.1} parent=0 // pred_region
    _
  $region29: #{generator_forward.1} parent=0 // pred_fallthru
    _
  // Predicated region
  $region30: #{generator_forward.1} parent=0 // pred_check
    _
  $region31: #{generator_forward.1} parent=0 // pred_check_branch
    %29 = sbr.rel (0) target = $region33
  $region32: #{generator_forward.1} parent=0 // pred_region
    _
  $region33: #{generator_forward.1} parent=0 // pred_fallthru
    _
  // Predicated region
  $region34: #{generator_forward.1} parent=0 // pred_check
    _
  $region35: #{generator_forward.1} parent=0 // pred_check_branch
    %31 = sbr.rel (0) target = $region37
  $region36: #{generator_forward.1} parent=0 // pred_region
    _
  $region37: #{generator_forward.1} parent=0 // pred_fallthru
    _
  %v32 = vld [vmem:[%s0] sm:$0xff]
  %v33 = vld [vmem:[%s1] sm:$0xff]
  %v34 = vld [vmem:[%s1 + $0x8] sm:$0xff]
  %v35 = vld [vmem:[%s1 + $0x10] sm:$0xff]
  %v36 = vld [vmem:[%s1 + $0x18] sm:$0xff]
  %v37 = vld [vmem:[%s1 + $0x20] sm:$0xff]
  %v38 = vld [vmem:[%s1 + $0x28] sm:$0xff]
  %v39 = vld [vmem:[%s1 + $0x30] sm:$0xff]
  %v40 = vld [vmem:[%s1 + $0x38] sm:$0xff]
  %v41 = vld [vmem:[%s1 + $0x40] sm:$0xff]
  %v42 = vld [vmem:[%s1 + $0x48] sm:$0xff]
  %v43 = vld [vmem:[%s1 + $0x50] sm:$0xff]
  %v44 = vld [vmem:[%s1 + $0x58] sm:$0xff]
  %v45 = vld [vmem:[%s1 + $0x60] sm:$0xff]
  %v46 = vld [vmem:[%s1 + $0x68] sm:$0xff]
  %v47 = vld [vmem:[%s1 + $0x70] sm:$0xff]
  %v48 = vld [vmem:[%s1 + $0x78] sm:$0xff]
  %v49 = vld [vmem:[%s2] sm:$0x1]
  %v51 = vlaneseq
  %v52 = vshrl.u32 %v51, 7
  %v53 = vsub.s32 0, %v52
  %v54 = vrot.slane %v49, %v53
  %56 = vmatprep.subr.mxu0 0.0
  %57 = vmatpush1.msra.mxu0 %v33
  %58 = vmatprep.subr.mxu0 0.0
  %59 = vmatpush1.msra.mxu0 %v34
  %60 = vmatprep.subr.mxu0 0.0
  %61 = vmatpush1.msra.mxu0 %v35
  %62 = vmatprep.subr.mxu0 0.0
  %63 = vmatpush1.msra.mxu0 %v36
  %64 = vmatprep.subr.mxu0 0.0
  %65 = vmatpush1.msra.mxu0 %v37
  %66 = vmatprep.subr.mxu0 0.0
  %67 = vmatpush1.msra.mxu0 %v38
  %68 = vmatprep.subr.mxu0 0.0
  %69 = vmatpush1.msra.mxu0 %v39
  %70 = vmatprep.subr.mxu0 0.0
  %71 = vmatpush1.msra.mxu0 %v40
  %72 = vmatprep.subr.mxu0 0.0
  %73 = vmatpush1.msra.mxu0 %v41
  %74 = vmatprep.subr.mxu0 0.0
  %75 = vmatpush1.msra.mxu0 %v42
  %76 = vmatprep.subr.mxu0 0.0
  %77 = vmatpush1.msra.mxu0 %v43
  %78 = vmatprep.subr.mxu0 0.0
  %79 = vmatpush1.msra.mxu0 %v44
  %80 = vmatprep.subr.mxu0 0.0
  %81 = vmatpush1.msra.mxu0 %v45
  %82 = vmatprep.subr.mxu0 0.0
  %83 = vmatpush1.msra.mxu0 %v46
  %84 = vmatprep.subr.mxu0 0.0
  %85 = vmatpush1.msra.mxu0 %v47
  %86 = vmatprep.subr.mxu0 0.0
  %87 = vmatpush1.msra.mxu0 %v48
  %88 = vmatprep.subr.mxu0 0.0
  %89 = vmatpush1.msra.mxu0 0.0
  %90 = vmatprep.subr.mxu0 0.0
  %91 = vmatpush1.msra.mxu0 0.0
  %92 = vmatprep.subr.mxu0 0.0
  %93 = vmatpush1.msra.mxu0 0.0
  %94 = vmatprep.subr.mxu0 0.0
  %95 = vmatpush1.msra.mxu0 0.0
  %96 = vmatprep.subr.mxu0 0.0
  %97 = vmatpush1.msra.mxu0 0.0
  %98 = vmatprep.subr.mxu0 0.0
  %99 = vmatpush1.msra.mxu0 0.0
  %100 = vmatprep.subr.mxu0 0.0
  %101 = vmatpush1.msra.mxu0 0.0
  %102 = vmatprep.subr.mxu0 0.0
  %103 = vmatpush1.msra.mxu0 0.0
  %104 = vmatprep.subr.mxu0 0.0
  %105 = vmatpush1.msra.mxu0 0.0
  %106 = vmatprep.subr.mxu0 0.0
  %107 = vmatpush1.msra.mxu0 0.0
  %108 = vmatprep.subr.mxu0 0.0
  %109 = vmatpush1.msra.mxu0 0.0
  %110 = vmatprep.subr.mxu0 0.0
  %111 = vmatpush1.msra.mxu0 0.0
  %112 = vmatprep.subr.mxu0 0.0
  %113 = vmatpush1.msra.mxu0 0.0
  %114 = vmatprep.subr.mxu0 0.0
  %115 = vmatpush1.msra.mxu0 0.0
  %116 = vmatprep.subr.mxu0 0.0
  %117 = vmatpush1.msra.mxu0 0.0
  %118 = vmatprep.subr.mxu0 0.0
  %119 = vmatpush1.msra.mxu0 0.0
  %120 = vmatprep.mubr.f32.mxu0 0.0
  %121 = vmatmul.mubr.f32.gmra.mrb[0].mxu0 %v32
  %v122 = vpop.f32.mrb[0].mxu0
  %v123 = vadd.f32 %v54, %v122
  %v124 = vpop.f32.mrb[0].mxu0
  %125 = vdwg.mxu0
  %v126 = vmax.f32 %v123, 0.0
  %v127 = vld [vmem:[%s3] sm:$0xff]
  %v128 = vld [vmem:[%s3 + $0x8] sm:$0xff]
  %v129 = vld [vmem:[%s3 + $0x10] sm:$0xff]
  %v130 = vld [vmem:[%s3 + $0x18] sm:$0xff]
  %v131 = vld [vmem:[%s3 + $0x20] sm:$0xff]
  %v132 = vld [vmem:[%s3 + $0x28] sm:$0xff]
  %v133 = vld [vmem:[%s3 + $0x30] sm:$0xff]
  %v134 = vld [vmem:[%s3 + $0x38] sm:$0xff]
  %v135 = vld [vmem:[%s3 + $0x40] sm:$0xff]
  %v136 = vld [vmem:[%s3 + $0x48] sm:$0xff]
  %v137 = vld [vmem:[%s3 + $0x50] sm:$0xff]
  %v138 = vld [vmem:[%s3 + $0x58] sm:$0xff]
  %v139 = vld [vmem:[%s3 + $0x60] sm:$0xff]
  %v140 = vld [vmem:[%s3 + $0x68] sm:$0xff]
  %v141 = vld [vmem:[%s3 + $0x70] sm:$0xff]
  %v142 = vld [vmem:[%s3 + $0x78] sm:$0xff]
  %v143 = vld [vmem:[%s4] sm:$0x1]
  %v145 = vlaneseq
  %v146 = vshrl.u32 %v145, 7
  %v147 = vsub.s32 0, %v146
  %v148 = vrot.slane %v143, %v147
  %150 = vmatprep.subr.mxu0 0.0
  %151 = vmatpush1.msra.mxu0 %v127
  %152 = vmatprep.subr.mxu0 0.0
  %153 = vmatpush1.msra.mxu0 %v128
  %154 = vmatprep.subr.mxu0 0.0
  %155 = vmatpush1.msra.mxu0 %v129
  %156 = vmatprep.subr.mxu0 0.0
  %157 = vmatpush1.msra.mxu0 %v130
  %158 = vmatprep.subr.mxu0 0.0
  %159 = vmatpush1.msra.mxu0 %v131
  %160 = vmatprep.subr.mxu0 0.0
  %161 = vmatpush1.msra.mxu0 %v132
  %162 = vmatprep.subr.mxu0 0.0
  %163 = vmatpush1.msra.mxu0 %v133
  %164 = vmatprep.subr.mxu0 0.0
  %165 = vmatpush1.msra.mxu0 %v134
  %166 = vmatprep.subr.mxu0 0.0
  %167 = vmatpush1.msra.mxu0 %v135
  %168 = vmatprep.subr.mxu0 0.0
  %169 = vmatpush1.msra.mxu0 %v136
  %170 = vmatprep.subr.mxu0 0.0
  %171 = vmatpush1.msra.mxu0 %v137
  %172 = vmatprep.subr.mxu0 0.0
  %173 = vmatpush1.msra.mxu0 %v138
  %174 = vmatprep.subr.mxu0 0.0
  %175 = vmatpush1.msra.mxu0 %v139
  %176 = vmatprep.subr.mxu0 0.0
  %177 = vmatpush1.msra.mxu0 %v140
  %178 = vmatprep.subr.mxu0 0.0
  %179 = vmatpush1.msra.mxu0 %v141
  %180 = vmatprep.subr.mxu0 0.0
  %181 = vmatpush1.msra.mxu0 %v142
  %182 = vmatprep.subr.mxu0 0.0
  %183 = vmatpush1.msra.mxu0 0.0
  %184 = vmatprep.subr.mxu0 0.0
  %185 = vmatpush1.msra.mxu0 0.0
  %186 = vmatprep.subr.mxu0 0.0
  %187 = vmatpush1.msra.mxu0 0.0
  %188 = vmatprep.subr.mxu0 0.0
  %189 = vmatpush1.msra.mxu0 0.0
  %190 = vmatprep.subr.mxu0 0.0
  %191 = vmatpush1.msra.mxu0 0.0
  %192 = vmatprep.subr.mxu0 0.0
  %193 = vmatpush1.msra.mxu0 0.0
  %194 = vmatprep.subr.mxu0 0.0
  %195 = vmatpush1.msra.mxu0 0.0
  %196 = vmatprep.subr.mxu0 0.0
  %197 = vmatpush1.msra.mxu0 0.0
  %198 = vmatprep.subr.mxu0 0.0
  %199 = vmatpush1.msra.mxu0 0.0
  %200 = vmatprep.subr.mxu0 0.0
  %201 = vmatpush1.msra.mxu0 0.0
  %202 = vmatprep.subr.mxu0 0.0
  %203 = vmatpush1.msra.mxu0 0.0
  %204 = vmatprep.subr.mxu0 0.0
  %205 = vmatpush1.msra.mxu0 0.0
  %206 = vmatprep.subr.mxu0 0.0
  %207 = vmatpush1.msra.mxu0 0.0
  %208 = vmatprep.subr.mxu0 0.0
  %209 = vmatpush1.msra.mxu0 0.0
  %210 = vmatprep.subr.mxu0 0.0
  %211 = vmatpush1.msra.mxu0 0.0
  %212 = vmatprep.subr.mxu0 0.0
  %213 = vmatpush1.msra.mxu0 0.0
  %214 = vmatprep.mubr.f32.mxu0 0.0
  %215 = vmatmul.mubr.f32.gmra.mrb[0].mxu0 %v126
  %v216 = vpop.f32.mrb[0].mxu0
  %v217 = vadd.f32 %v148, %v216
  %v218 = vpop.f32.mrb[0].mxu0
  %219 = vdwg.mxu0
  %v220 = vmax.f32 %v217, 0.0
  %v221 = vld [vmem:[%s5] sm:$0xff]
  %v222 = vld [vmem:[%s5 + $0x8] sm:$0xff]
  %v223 = vld [vmem:[%s5 + $0x10] sm:$0xff]
  %v224 = vld [vmem:[%s5 + $0x18] sm:$0xff]
  %v225 = vld [vmem:[%s5 + $0x20] sm:$0xff]
  %v226 = vld [vmem:[%s5 + $0x28] sm:$0xff]
  %v227 = vld [vmem:[%s5 + $0x30] sm:$0xff]
  %v228 = vld [vmem:[%s5 + $0x38] sm:$0xff]
  %v229 = vld [vmem:[%s5 + $0x40] sm:$0xff]
  %v230 = vld [vmem:[%s5 + $0x48] sm:$0xff]
  %v231 = vld [vmem:[%s5 + $0x50] sm:$0xff]
  %v232 = vld [vmem:[%s5 + $0x58] sm:$0xff]
  %v233 = vld [vmem:[%s5 + $0x60] sm:$0xff]
  %v234 = vld [vmem:[%s5 + $0x68] sm:$0xff]
  %v235 = vld [vmem:[%s5 + $0x70] sm:$0xff]
  %v236 = vld [vmem:[%s5 + $0x78] sm:$0xff]
  %v237 = vld [vmem:[%s6] sm:$0x1]
  %v239 = vlaneseq
  %v240 = vshrl.u32 %v239, 7
  %v241 = vsub.s32 0, %v240
  %v242 = vrot.slane %v237, %v241
  %244 = vmatprep.subr.mxu0 0.0
  %245 = vmatpush1.msra.mxu0 %v221
  %246 = vmatprep.subr.mxu0 0.0
  %247 = vmatpush1.msra.mxu0 %v222
  %248 = vmatprep.subr.mxu0 0.0
  %249 = vmatpush1.msra.mxu0 %v223
  %250 = vmatprep.subr.mxu0 0.0
  %251 = vmatpush1.msra.mxu0 %v224
  %252 = vmatprep.subr.mxu0 0.0
  %253 = vmatpush1.msra.mxu0 %v225
  %254 = vmatprep.subr.mxu0 0.0
  %255 = vmatpush1.msra.mxu0 %v226
  %256 = vmatprep.subr.mxu0 0.0
  %257 = vmatpush1.msra.mxu0 %v227
  %258 = vmatprep.subr.mxu0 0.0
  %259 = vmatpush1.msra.mxu0 %v228
  %260 = vmatprep.subr.mxu0 0.0
  %261 = vmatpush1.msra.mxu0 %v229
  %262 = vmatprep.subr.mxu0 0.0
  %263 = vmatpush1.msra.mxu0 %v230
  %264 = vmatprep.subr.mxu0 0.0
  %265 = vmatpush1.msra.mxu0 %v231
  %266 = vmatprep.subr.mxu0 0.0
  %267 = vmatpush1.msra.mxu0 %v232
  %268 = vmatprep.subr.mxu0 0.0
  %269 = vmatpush1.msra.mxu0 %v233
  %270 = vmatprep.subr.mxu0 0.0
  %271 = vmatpush1.msra.mxu0 %v234
  %272 = vmatprep.subr.mxu0 0.0
  %273 = vmatpush1.msra.mxu0 %v235
  %274 = vmatprep.subr.mxu0 0.0
  %275 = vmatpush1.msra.mxu0 %v236
  %276 = vmatprep.subr.mxu0 0.0
  %277 = vmatpush1.msra.mxu0 0.0
  %278 = vmatprep.subr.mxu0 0.0
  %279 = vmatpush1.msra.mxu0 0.0
  %280 = vmatprep.subr.mxu0 0.0
  %281 = vmatpush1.msra.mxu0 0.0
  %282 = vmatprep.subr.mxu0 0.0
  %283 = vmatpush1.msra.mxu0 0.0
  %284 = vmatprep.subr.mxu0 0.0
  %285 = vmatpush1.msra.mxu0 0.0
  %286 = vmatprep.subr.mxu0 0.0
  %287 = vmatpush1.msra.mxu0 0.0
  %288 = vmatprep.subr.mxu0 0.0
  %289 = vmatpush1.msra.mxu0 0.0
  %290 = vmatprep.subr.mxu0 0.0
  %291 = vmatpush1.msra.mxu0 0.0
  %292 = vmatprep.subr.mxu0 0.0
  %293 = vmatpush1.msra.mxu0 0.0
  %294 = vmatprep.subr.mxu0 0.0
  %295 = vmatpush1.msra.mxu0 0.0
  %296 = vmatprep.subr.mxu0 0.0
  %297 = vmatpush1.msra.mxu0 0.0
  %298 = vmatprep.subr.mxu0 0.0
  %299 = vmatpush1.msra.mxu0 0.0
  %300 = vmatprep.subr.mxu0 0.0
  %301 = vmatpush1.msra.mxu0 0.0
  %302 = vmatprep.subr.mxu0 0.0
  %303 = vmatpush1.msra.mxu0 0.0
  %304 = vmatprep.subr.mxu0 0.0
  %305 = vmatpush1.msra.mxu0 0.0
  %306 = vmatprep.subr.mxu0 0.0
  %307 = vmatpush1.msra.mxu0 0.0
  %308 = vmatprep.mubr.f32.mxu0 0.0
  %309 = vmatmul.mubr.f32.gmra.mrb[0].mxu0 %v220
  %v310 = vpop.f32.mrb[0].mxu0
  %v311 = vadd.f32 %v242, %v310
  %v312 = vpop.f32.mrb[0].mxu0
  %313 = vdwg.mxu0
  %v314 = vmax.f32 %v311, 0.0
  %v315 = vld [vmem:[%s7] sm:$0xff]
  %v316 = vld [vmem:[%s7 + $0x8] sm:$0xff]
  %v317 = vld [vmem:[%s7 + $0x10] sm:$0xff]
  %v318 = vld [vmem:[%s7 + $0x18] sm:$0xff]
  %v319 = vld [vmem:[%s7 + $0x20] sm:$0xff]
  %v320 = vld [vmem:[%s7 + $0x28] sm:$0xff]
  %v321 = vld [vmem:[%s7 + $0x30] sm:$0xff]
  %v322 = vld [vmem:[%s7 + $0x38] sm:$0xff]
  %v323 = vld [vmem:[%s7 + $0x40] sm:$0xff]
  %v324 = vld [vmem:[%s7 + $0x48] sm:$0xff]
  %v325 = vld [vmem:[%s7 + $0x50] sm:$0xff]
  %v326 = vld [vmem:[%s7 + $0x58] sm:$0xff]
  %v327 = vld [vmem:[%s7 + $0x60] sm:$0xff]
  %v328 = vld [vmem:[%s7 + $0x68] sm:$0xff]
  %v329 = vld [vmem:[%s7 + $0x70] sm:$0xff]
  %v330 = vld [vmem:[%s7 + $0x78] sm:$0xff]
  %v331 = vld [vmem:[%s8] sm:$0x1]
  %v333 = vlaneseq
  %v334 = vshrl.u32 %v333, 7
  %v335 = vsub.s32 0, %v334
  %v336 = vrot.slane %v331, %v335
  %338 = vmatprep.subr.mxu0 0.0
  %339 = vmatpush1.msra.mxu0 %v315
  %340 = vmatprep.subr.mxu0 0.0
  %341 = vmatpush1.msra.mxu0 %v316
  %342 = vmatprep.subr.mxu0 0.0
  %343 = vmatpush1.msra.mxu0 %v317
  %344 = vmatprep.subr.mxu0 0.0
  %345 = vmatpush1.msra.mxu0 %v318
  %346 = vmatprep.subr.mxu0 0.0
  %347 = vmatpush1.msra.mxu0 %v319
  %348 = vmatprep.subr.mxu0 0.0
  %349 = vmatpush1.msra.mxu0 %v320
  %350 = vmatprep.subr.mxu0 0.0
  %351 = vmatpush1.msra.mxu0 %v321
  %352 = vmatprep.subr.mxu0 0.0
  %353 = vmatpush1.msra.mxu0 %v322
  %354 = vmatprep.subr.mxu0 0.0
  %355 = vmatpush1.msra.mxu0 %v323
  %356 = vmatprep.subr.mxu0 0.0
  %357 = vmatpush1.msra.mxu0 %v324
  %358 = vmatprep.subr.mxu0 0.0
  %359 = vmatpush1.msra.mxu0 %v325
  %360 = vmatprep.subr.mxu0 0.0
  %361 = vmatpush1.msra.mxu0 %v326
  %362 = vmatprep.subr.mxu0 0.0
  %363 = vmatpush1.msra.mxu0 %v327
  %364 = vmatprep.subr.mxu0 0.0
  %365 = vmatpush1.msra.mxu0 %v328
  %366 = vmatprep.subr.mxu0 0.0
  %367 = vmatpush1.msra.mxu0 %v329
  %368 = vmatprep.subr.mxu0 0.0
  %369 = vmatpush1.msra.mxu0 %v330
  %370 = vmatprep.subr.mxu0 0.0
  %371 = vmatpush1.msra.mxu0 0.0
  %372 = vmatprep.subr.mxu0 0.0
  %373 = vmatpush1.msra.mxu0 0.0
  %374 = vmatprep.subr.mxu0 0.0
  %375 = vmatpush1.msra.mxu0 0.0
  %376 = vmatprep.subr.mxu0 0.0
  %377 = vmatpush1.msra.mxu0 0.0
  %378 = vmatprep.subr.mxu0 0.0
  %379 = vmatpush1.msra.mxu0 0.0
  %380 = vmatprep.subr.mxu0 0.0
  %381 = vmatpush1.msra.mxu0 0.0
  %382 = vmatprep.subr.mxu0 0.0
  %383 = vmatpush1.msra.mxu0 0.0
  %384 = vmatprep.subr.mxu0 0.0
  %385 = vmatpush1.msra.mxu0 0.0
  %386 = vmatprep.subr.mxu0 0.0
  %387 = vmatpush1.msra.mxu0 0.0
  %388 = vmatprep.subr.mxu0 0.0
  %389 = vmatpush1.msra.mxu0 0.0
  %390 = vmatprep.subr.mxu0 0.0
  %391 = vmatpush1.msra.mxu0 0.0
  %392 = vmatprep.subr.mxu0 0.0
  %393 = vmatpush1.msra.mxu0 0.0
  %394 = vmatprep.subr.mxu0 0.0
  %395 = vmatpush1.msra.mxu0 0.0
  %396 = vmatprep.subr.mxu0 0.0
  %397 = vmatpush1.msra.mxu0 0.0
  %398 = vmatprep.subr.mxu0 0.0
  %399 = vmatpush1.msra.mxu0 0.0
  %400 = vmatprep.subr.mxu0 0.0
  %401 = vmatpush1.msra.mxu0 0.0
  %402 = vmatprep.mubr.f32.mxu0 0.0
  %403 = vmatmul.mubr.f32.gmra.mrb[0].mxu0 %v314
  %v404 = vpop.f32.mrb[0].mxu0
  %v405 = vadd.f32 %v336, %v404
  %v406 = vpop.f32.mrb[0].mxu0
  %407 = vdwg.mxu0
  %408 = vst [vmem:[%s9] sm:$0xff] %v405
  // Predicated region
  $region38: #{generator_forward.1} parent=0 // pred_check
    _
  $region39: #{generator_forward.1} parent=0 // pred_check_branch
    %410 = sbr.rel (0) target = $region41
  $region40: #{generator_forward.1} parent=0 // pred_region
    _
  $region41: #{generator_forward.1} parent=0 // pred_fallthru
    _
  // Predicated region
  $region42: #{generator_forward.1} parent=0 // pred_check
    _
  $region43: #{generator_forward.1} parent=0 // pred_check_branch
    %412 = sbr.rel (0) target = $region45
  $region44: #{generator_forward.1} parent=0 // pred_region
    _
  $region45: #{generator_forward.1} parent=0 // pred_fallthru
    _

</llo_original>
